<compile_context>
chip_gen: v7x
topology: tpu7x:2x2x1
jax: 0.10.0
libtpu: 0.0.40
codegen_flags: <defaults>
</compile_context>

<pallas_src>
import functools

import jax
import jax.numpy as jnp
from jax.experimental import pallas as pl
from jax.experimental.pallas import tpu as pltpu


def _round_up(n, m):
    return ((n + m - 1) // m) * m


def _vector_model_kernel(x_ref, w1_ref, b1_ref, w2_ref, b2_ref, w3_ref, b3_ref,
                         o_ref):
    """Fused 3-layer MLP (BN pre-folded). bf16 matmuls, f32 accumulate."""
    x = x_ref[...]  # already bf16 from the wrapper

    # --- Linear(flen, 512) [+ folded BN] + ReLU (Dropout = identity) ---
    h = jnp.dot(x, w1_ref[...], preferred_element_type=jnp.float32)
    h = jnp.maximum(h + b1_ref[...], 0.0)

    # --- Linear(512, 128) [+ folded BN] + ReLU (Dropout = identity) ---
    h = jnp.dot(h.astype(jnp.bfloat16), w2_ref[...],
                preferred_element_type=jnp.float32)
    h = jnp.maximum(h + b2_ref[...], 0.0)

    # --- Linear(128, intermediate_rep) [+ folded BN] ---
    h = jnp.dot(h.astype(jnp.bfloat16), w3_ref[...],
                preferred_element_type=jnp.float32)
    h = h + b3_ref[...]

    o_ref[...] = h.astype(o_ref.dtype)


@functools.partial(jax.jit, static_argnames=("tile_b",))
def vector_model_forward(x, params, tile_b=512):
    """x: (B, flen) float32. params: dict with bf16 folded weights + f32 bias."""
    B, flen = x.shape
    flen_p = params["w1"].shape[0]      # flen padded to multiple of 128 at init
    d1 = params["w1"].shape[1]
    d2 = params["w2"].shape[1]
    d3 = params["w3"].shape[1]

    # Pad feature dim (zero columns match zero rows padded into w1).
    if flen_p != flen:
        x = jnp.pad(x, ((0, 0), (0, flen_p - flen)))

    # Pick an effective batch tile and pad the batch so it divides evenly.
    tile = min(tile_b, _round_up(B, 8))
    b_pad = _round_up(B, tile)
    if b_pad != B:
        x = jnp.pad(x, ((0, b_pad - B), (0, 0)))

    # Halve the dominant input DMA traffic: feed the kernel bf16 activations.
    x = x.astype(jnp.bfloat16)

    full = lambda r, c: pl.BlockSpec((r, c), lambda i: (0, 0))

    grid_spec = pltpu.PrefetchScalarGridSpec(
        num_scalar_prefetch=0,
        grid=(b_pad // tile,),
        in_specs=[
            pl.BlockSpec((tile, flen_p), lambda i: (i, 0)),   # x tile over batch
            full(flen_p, d1), full(1, d1),
            full(d1, d2), full(1, d2),
            full(d2, d3), full(1, d3),
        ],
        out_specs=pl.BlockSpec((tile, d3), lambda i: (i, 0)),
    )

    out = pl.pallas_call(
        _vector_model_kernel,
        out_shape=jax.ShapeDtypeStruct((b_pad, d3), jnp.float32),
        grid_spec=grid_spec,
        compiler_params=pltpu.CompilerParams(
            dimension_semantics=("parallel",)
        ),
    )(
        x,
        params["w1"], params["b1"],
        params["w2"], params["b2"],
        params["w3"], params["b3"],
    )

    if b_pad != B:
        out = out[:B]
    return out


def init_params(key, flen, intermediate_rep=128, eps=1e-5):
    """Synthetic Linear + BatchNorm1d params; BN folded into weights/bias.

    Returns (kernel_params, ref_params):
      kernel_params: bf16 folded weights (w1 row-padded to mult. of 128),
                     f32 folded biases of shape (1, dout).
      ref_params:    f32 folded weights/biases, unpadded (for the reference).
    """
    dims = [(flen, 512), (512, 128), (128, intermediate_rep)]
    kparams, rparams = {}, {}
    flen_p = _round_up(max(flen, 128), 128)
    for idx, (din, dout) in enumerate(dims, start=1):
        key, kw, kb, kg, kbeta, km, kv = jax.random.split(key, 7)
        w = jax.random.normal(kw, (din, dout), jnp.float32) * (1.0 / jnp.sqrt(din))
        b = jax.random.normal(kb, (1, dout), jnp.float32) * 0.01
        gamma = 1.0 + 0.1 * jax.random.normal(kg, (1, dout), jnp.float32)
        beta = 0.1 * jax.random.normal(kbeta, (1, dout), jnp.float32)
        run_mean = 0.1 * jax.random.normal(km, (1, dout), jnp.float32)
        run_var = jnp.abs(jax.random.normal(kv, (1, dout), jnp.float32)) + 0.5
        # Fold BN (eval mode):  y = (x@W + b - mean) * g/sqrt(v+eps) + beta
        scale = gamma * jax.lax.rsqrt(run_var + eps)          # (1, dout)
        shift = beta - run_mean * scale                       # (1, dout)
        w_f = w * scale                                       # column-wise scale
        b_f = b * scale + shift

        rparams[f"w{idx}"] = w_f
        rparams[f"b{idx}"] = b_f

        w_k = w_f
        if idx == 1 and flen_p != din:                        # pad K for layer 1
            w_k = jnp.pad(w_f, ((0, flen_p - din), (0, 0)))
        kparams[f"w{idx}"] = w_k.astype(jnp.bfloat16)
        kparams[f"b{idx}"] = b_f
    return kparams, rparams


def reference_forward_f32(x, rp):
    """Pure-f32 reference (module semantics, BN folded)."""
    h = jnp.maximum(x @ rp["w1"] + rp["b1"], 0.0)
    h = jnp.maximum(h @ rp["w2"] + rp["b2"], 0.0)
    return h @ rp["w3"] + rp["b3"]


def reference_forward_bf16(x, rp):
    """Reference matching the kernel's bf16-input / f32-accumulate matmuls."""
    bf = jnp.bfloat16
    h = jnp.dot(x.astype(bf), rp["w1"].astype(bf),
                preferred_element_type=jnp.float32) + rp["b1"]
    h = jnp.maximum(h, 0.0)
    h = jnp.dot(h.astype(bf), rp["w2"].astype(bf),
                preferred_element_type=jnp.float32) + rp["b2"]
    h = jnp.maximum(h, 0.0)
    h = jnp.dot(h.astype(bf), rp["w3"].astype(bf),
                preferred_element_type=jnp.float32) + rp["b3"]
    return h


if __name__ == "__main__":
    FLEN = 64            # feature_length
    DROPOUT_RATE = 0.5   # identity at inference
    INTERMEDIATE = 128

    key = jax.random.PRNGKey(0)
    key, kp, kx1, kx2 = jax.random.split(key, 4)
    kparams, rparams = init_params(kp, FLEN, INTERMEDIATE)

    # Small primary check (B=8).
    x_small = jax.random.normal(kx1, (8, FLEN), jnp.float32)
    out_small = jax.block_until_ready(vector_model_forward(x_small, kparams))
    assert out_small.shape == (8, INTERMEDIATE)
    ref_bf = reference_forward_bf16(x_small, rparams)
    ref_f32 = reference_forward_f32(x_small, rparams)
    assert jnp.allclose(out_small, ref_bf, atol=2e-3, rtol=2e-3), "mismatch vs bf16 ref"
    assert jnp.allclose(out_small, ref_f32, atol=1e-1, rtol=5e-2), "mismatch vs f32 ref"

    # Secondary check: non-multiple batch exercising padding + multi-tile grid.
    x_big = jax.random.normal(kx2, (300, FLEN), jnp.float32)
    out_big = jax.block_until_ready(vector_model_forward(x_big, kparams, tile_b=128))
    assert out_big.shape == (300, INTERMEDIATE)
    ref_big = reference_forward_bf16(x_big, rparams)
    assert jnp.allclose(out_big, ref_big, atol=2e-3, rtol=2e-3), "mismatch (padded batch)"

    print("KERNEL_OK")
</pallas_src>

<mosaic_0001>
module attributes {stable_mosaic.version = 11 : i64} {
  func.func @_vector_model_kernel(%arg0: i32, %arg1: memref<8x128xbf16, #tpu.memory_space<vmem>>, %arg2: memref<128x512xbf16, #tpu.memory_space<vmem>>, %arg3: memref<1x512xf32, #tpu.memory_space<vmem>>, %arg4: memref<512x128xbf16, #tpu.memory_space<vmem>>, %arg5: memref<1x128xf32, #tpu.memory_space<vmem>>, %arg6: memref<128x128xbf16, #tpu.memory_space<vmem>>, %arg7: memref<1x128xf32, #tpu.memory_space<vmem>>, %arg8: memref<8x128xf32, #tpu.memory_space<vmem>>) attributes {dimension_semantics = [#tpu.dimension_semantics<parallel>], iteration_bounds = array<i64: 1>, scalar_prefetch = 0 : i64, scratch_operands = 0 : i64, tpu.core_type = #tpu.core_type<tc>, window_params = [{transform_indices = @transform_0, window_bounds = array<i64: 8, 128>}, {pipeline_mode = #tpu.pipeline_mode<synchronous>, transform_indices = @transform_1, window_bounds = array<i64: 128, 512>}, {pipeline_mode = #tpu.pipeline_mode<synchronous>, transform_indices = @transform_2, window_bounds = array<i64: 1, 512>}, {pipeline_mode = #tpu.pipeline_mode<synchronous>, transform_indices = @transform_3, window_bounds = array<i64: 512, 128>}, {pipeline_mode = #tpu.pipeline_mode<synchronous>, transform_indices = @transform_4, window_bounds = array<i64: 1, 128>}, {pipeline_mode = #tpu.pipeline_mode<synchronous>, transform_indices = @transform_5, window_bounds = array<i64: 128, 128>}, {pipeline_mode = #tpu.pipeline_mode<synchronous>, transform_indices = @transform_6, window_bounds = array<i64: 1, 128>}, {transform_indices = @transform_7, window_bounds = array<i64: 8, 128>}]} {
    %c0 = arith.constant 0 : index
    %c0_0 = arith.constant 0 : index
    %0 = vector.load %arg1[%c0, %c0_0] : memref<8x128xbf16, #tpu.memory_space<vmem>>, vector<8x128xbf16>
    %c0_1 = arith.constant 0 : index
    %c0_2 = arith.constant 0 : index
    %1 = vector.load %arg2[%c0_1, %c0_2] : memref<128x512xbf16, #tpu.memory_space<vmem>>, vector<128x512xbf16>
    %cst = arith.constant dense<0.000000e+00> : vector<8x512xf32>
    %2 = tpu.matmul %0, %1, %cst {dimension_numbers = #tpu.dot_dimension_numbers<[1], [0], [0], [1], [0, 0, 1, 1], [], []>} : vector<8x128xbf16>, vector<128x512xbf16>, vector<8x512xf32> -> vector<8x512xf32>
    %c0_3 = arith.constant 0 : index
    %c0_4 = arith.constant 0 : index
    %3 = vector.load %arg3[%c0_3, %c0_4] : memref<1x512xf32, #tpu.memory_space<vmem>>, vector<1x512xf32>
    %4 = vector.broadcast %3 : vector<1x512xf32> to vector<8x512xf32>
    %5 = arith.addf %2, %4 : vector<8x512xf32>
    %cst_5 = arith.constant 0.000000e+00 : f32
    %6 = vector.broadcast %cst_5 : f32 to vector<8x512xf32>
    %7 = arith.maximumf %5, %6 : vector<8x512xf32>
    %8 = arith.truncf %7 : vector<8x512xf32> to vector<8x512xbf16>
    %c0_6 = arith.constant 0 : index
    %c0_7 = arith.constant 0 : index
    %9 = vector.load %arg4[%c0_6, %c0_7] : memref<512x128xbf16, #tpu.memory_space<vmem>>, vector<512x128xbf16>
    %cst_8 = arith.constant dense<0.000000e+00> : vector<8x128xf32>
    %10 = tpu.matmul %8, %9, %cst_8 {dimension_numbers = #tpu.dot_dimension_numbers<[1], [0], [0], [1], [0, 0, 1, 1], [], []>} : vector<8x512xbf16>, vector<512x128xbf16>, vector<8x128xf32> -> vector<8x128xf32>
    %c0_9 = arith.constant 0 : index
    %c0_10 = arith.constant 0 : index
    %11 = vector.load %arg5[%c0_9, %c0_10] : memref<1x128xf32, #tpu.memory_space<vmem>>, vector<1x128xf32>
    %12 = vector.broadcast %11 : vector<1x128xf32> to vector<8x128xf32>
    %13 = arith.addf %10, %12 : vector<8x128xf32>
    %cst_11 = arith.constant 0.000000e+00 : f32
    %14 = vector.broadcast %cst_11 : f32 to vector<8x128xf32>
    %15 = arith.maximumf %13, %14 : vector<8x128xf32>
    %16 = arith.truncf %15 : vector<8x128xf32> to vector<8x128xbf16>
    %c0_12 = arith.constant 0 : index
    %c0_13 = arith.constant 0 : index
    %17 = vector.load %arg6[%c0_12, %c0_13] : memref<128x128xbf16, #tpu.memory_space<vmem>>, vector<128x128xbf16>
    %cst_14 = arith.constant dense<0.000000e+00> : vector<8x128xf32>
    %18 = tpu.matmul %16, %17, %cst_14 {dimension_numbers = #tpu.dot_dimension_numbers<[1], [0], [0], [1], [0, 0, 1, 1], [], []>} : vector<8x128xbf16>, vector<128x128xbf16>, vector<8x128xf32> -> vector<8x128xf32>
    %c0_15 = arith.constant 0 : index
    %c0_16 = arith.constant 0 : index
    %19 = vector.load %arg7[%c0_15, %c0_16] : memref<1x128xf32, #tpu.memory_space<vmem>>, vector<1x128xf32>
    %20 = vector.broadcast %19 : vector<1x128xf32> to vector<8x128xf32>
    %21 = arith.addf %18, %20 : vector<8x128xf32>
    %c0_17 = arith.constant 0 : index
    %c0_18 = arith.constant 0 : index
    %22 = vector.load %arg8[%c0_17, %c0_18] : memref<8x128xf32, #tpu.memory_space<vmem>>, vector<8x128xf32>
    tpu.vector_store %arg8[%c0_17, %c0_18], %21 {strides = array<i32>} : memref<8x128xf32, #tpu.memory_space<vmem>>, vector<8x128xf32>,
    return
  }
  func.func @transform_0(%arg0: i32) -> (i32, i32) {
    %c0_i32 = arith.constant 0 : i32
    %c0_i32_0 = arith.constant 0 : i32
    return %arg0, %c0_i32 : i32, i32
  }
  func.func @transform_1(%arg0: i32) -> (i32, i32) {
    %c0_i32 = arith.constant 0 : i32
    %c0_i32_0 = arith.constant 0 : i32
    %c0_i32_1 = arith.constant 0 : i32
    return %c0_i32, %c0_i32_0 : i32, i32
  }
  func.func @transform_2(%arg0: i32) -> (i32, i32) {
    %c0_i32 = arith.constant 0 : i32
    %c0_i32_0 = arith.constant 0 : i32
    %c0_i32_1 = arith.constant 0 : i32
    return %c0_i32, %c0_i32_0 : i32, i32
  }
  func.func @transform_3(%arg0: i32) -> (i32, i32) {
    %c0_i32 = arith.constant 0 : i32
    %c0_i32_0 = arith.constant 0 : i32
    %c0_i32_1 = arith.constant 0 : i32
    return %c0_i32, %c0_i32_0 : i32, i32
  }
  func.func @transform_4(%arg0: i32) -> (i32, i32) {
    %c0_i32 = arith.constant 0 : i32
    %c0_i32_0 = arith.constant 0 : i32
    %c0_i32_1 = arith.constant 0 : i32
    return %c0_i32, %c0_i32_0 : i32, i32
  }
  func.func @transform_5(%arg0: i32) -> (i32, i32) {
    %c0_i32 = arith.constant 0 : i32
    %c0_i32_0 = arith.constant 0 : i32
    %c0_i32_1 = arith.constant 0 : i32
    return %c0_i32, %c0_i32_0 : i32, i32
  }
  func.func @transform_6(%arg0: i32) -> (i32, i32) {
    %c0_i32 = arith.constant 0 : i32
    %c0_i32_0 = arith.constant 0 : i32
    %c0_i32_1 = arith.constant 0 : i32
    return %c0_i32, %c0_i32_0 : i32, i32
  }
  func.func @transform_7(%arg0: i32) -> (i32, i32) {
    %c0_i32 = arith.constant 0 : i32
    %c0_i32_0 = arith.constant 0 : i32
    return %arg0, %c0_i32 : i32, i32
  }
}

</mosaic_0001>

<llo_original>
// kernel: vector_model_forward.1
$region0: #{vector_model_forward.1}
  #allocation0 [shape = 'u32[]', space=smem, size = 0x4, offset = 0x4, fixed_abs, tag = 'smem constant byte address 0x4 - core index']
  #allocation1 [shape = 'u32[144,128]{1,0:T(1,128)}', space=vmem, size = 0x12000, scoped, tag = 'internal scratch']
  %s0 = inlined_call_operand.vmem [shape: bf16[8,128], index: 0, kind: input, shape index: {}]
  %s1 = inlined_call_operand.hbm [shape: bf16[128,512], index: 1, kind: input, shape index: {}]
  %s2 = inlined_call_operand.vmem [shape: f32[1,512], index: 2, kind: input, shape index: {}]
  %s3 = inlined_call_operand.hbm [shape: bf16[512,128], index: 3, kind: input, shape index: {}]
  %s4 = inlined_call_operand.vmem [shape: f32[1,128], index: 4, kind: input, shape index: {}]
  %s5 = inlined_call_operand.hbm [shape: bf16[128,128], index: 5, kind: input, shape index: {}]
  %s6 = inlined_call_operand.vmem [shape: f32[1,128], index: 6, kind: input, shape index: {}]
  %s7 = inlined_call_operand.hbm [shape: f32[8,128], index: 7, kind: output, shape index: {}]
  %s8 = sld [smem:[#allocation0]]
  $region50: #{vector_model_forward.1} parent=0
    _
  %s10 = ssub.s32 1, %s8
  %s11 = scalar_select 0, %s10, %s8
  $region1: #{vector_model_forward.1} parent=0
    #allocation2 [shape = 'u8[131072]{0}', space=vmem, size = 0x20000, scoped, tag = 'input window, operand 1, single buffered']
    #allocation3 [shape = 's32[1]{0}', space=sflag, size = 0x4, scoped, tag = 'scoped memory for vector_model_forward.1']
    #allocation4 [shape = 's32[1]{0}', space=sflag, size = 0x4, scoped, tag = 'scoped memory for vector_model_forward.1']
    #allocation5 [shape = 'u8[131072]{0}', space=vmem, size = 0x20000, scoped, tag = 'input window, operand 3, single buffered']
    #allocation6 [shape = 's32[1]{0}', space=sflag, size = 0x4, scoped, tag = 'scoped memory for vector_model_forward.1']
    #allocation7 [shape = 'u8[32768]{0}', space=vmem, size = 0x8000, scoped, tag = 'input window, operand 5, single buffered']
    #allocation8 [shape = 'u8[4096]{0}', space=vmem, size = 0x1000, scoped, tag = 'output window, operand 0, single buffered']
    %12 = vsyncpa [#allocation3], 0
    %13 = vsyncpa [#allocation6], 0
    %14 = vsyncpa [#allocation4], 0
    // Predicated region
    $region2: #{vector_model_forward.1} parent=1 // pred_check
      _
    $region3: #{vector_model_forward.1} parent=1 // pred_check_branch
      %16 = sbr.rel (0) target = $region5
    $region4: #{vector_model_forward.1} parent=1 // pred_region
      _
    $region5: #{vector_model_forward.1} parent=1 // pred_fallthru
      _
    // Predicated region
    $region6: #{vector_model_forward.1} parent=1 // pred_check
      _
    $region7: #{vector_model_forward.1} parent=1 // pred_check_branch
      %18 = sbr.rel (0) target = $region9
    $region8: #{vector_model_forward.1} parent=1 // pred_region
      %s20 = ssub.s32 4096, 4096
      %21 = vsyncadd [#allocation3], %s20
      %s22 = sshll.u32 [#allocation2], 4
      %s23 = int_to_ptr.vmem [resolvable:$true] %s22
      %28 = dma.hbm_to_vmem [thread:$0]  %s1, 4096, %s23, [#allocation3], 256, 256, 16
    $region9: #{vector_model_forward.1} parent=1 // pred_fallthru
      _
    // Predicated region
    $region10: #{vector_model_forward.1} parent=1 // pred_check
      _
    $region11: #{vector_model_forward.1} parent=1 // pred_check_branch
      %30 = sbr.rel (0) target = $region13
    $region12: #{vector_model_forward.1} parent=1 // pred_region
      _
    $region13: #{vector_model_forward.1} parent=1 // pred_fallthru
      _
    // Predicated region
    $region14: #{vector_model_forward.1} parent=1 // pred_check
      _
    $region15: #{vector_model_forward.1} parent=1 // pred_check_branch
      %32 = sbr.rel (0) target = $region17
    $region16: #{vector_model_forward.1} parent=1 // pred_region
      %s34 = ssub.s32 4096, 4096
      %35 = vsyncadd [#allocation6], %s34
      %s36 = sshll.u32 [#allocation5], 4
      %s37 = int_to_ptr.vmem [resolvable:$true] %s36
      %42 = dma.hbm_to_vmem [thread:$0]  %s3, 4096, %s37, [#allocation6], 64, 64, 4
    $region17: #{vector_model_forward.1} parent=1 // pred_fallthru
      _
    // Predicated region
    $region18: #{vector_model_forward.1} parent=1 // pred_check
      _
    $region19: #{vector_model_forward.1} parent=1 // pred_check_branch
      %44 = sbr.rel (0) target = $region21
    $region20: #{vector_model_forward.1} parent=1 // pred_region
      _
    $region21: #{vector_model_forward.1} parent=1 // pred_fallthru
      _
    // Predicated region
    $region22: #{vector_model_forward.1} parent=1 // pred_check
      _
    $region23: #{vector_model_forward.1} parent=1 // pred_check_branch
      %46 = sbr.rel (0) target = $region25
    $region24: #{vector_model_forward.1} parent=1 // pred_region
      %s48 = ssub.s32 1024, 1024
      %49 = vsyncadd [#allocation6], %s48
      %s50 = sshll.u32 [#allocation7], 4
      %s51 = int_to_ptr.vmem [resolvable:$true] %s50
      %56 = dma.hbm_to_vmem [thread:$0]  %s5, 1024, %s51, [#allocation6], 64, 64, 4
    $region25: #{vector_model_forward.1} parent=1 // pred_fallthru
      _
    // Predicated region
    $region26: #{vector_model_forward.1} parent=1 // pred_check
      _
    $region27: #{vector_model_forward.1} parent=1 // pred_check_branch
      %58 = sbr.rel (0) target = $region29
    $region28: #{vector_model_forward.1} parent=1 // pred_region
      _
    $region29: #{vector_model_forward.1} parent=1 // pred_fallthru
      _
    // Predicated region
    $region30: #{vector_model_forward.1} parent=1 // pred_check
      _
    $region31: #{vector_model_forward.1} parent=1 // pred_check_branch
      %60 = sbr.rel (0) target = $region33
    $region32: #{vector_model_forward.1} parent=1 // pred_region
      %61 = dma.done [#allocation3], 4096
    $region33: #{vector_model_forward.1} parent=1 // pred_fallthru
      _
    // Predicated region
    $region34: #{vector_model_forward.1} parent=1 // pred_check
      _
    $region35: #{vector_model_forward.1} parent=1 // pred_check_branch
      %63 = sbr.rel (0) target = $region37
    $region36: #{vector_model_forward.1} parent=1 // pred_region
      %64 = dma.done [#allocation6], 4096
    $region37: #{vector_model_forward.1} parent=1 // pred_fallthru
      _
    // Predicated region
    $region38: #{vector_model_forward.1} parent=1 // pred_check
      _
    $region39: #{vector_model_forward.1} parent=1 // pred_check_branch
      %66 = sbr.rel (0) target = $region41
    $region40: #{vector_model_forward.1} parent=1 // pred_region
      %67 = dma.done [#allocation6], 1024
    $region41: #{vector_model_forward.1} parent=1 // pred_fallthru
      _
    %v69 = vld [vmem:[%s0] sm:$0xf]
    %v70 = vld [vmem:[#allocation2] sm:$0xff]
    %v71 = vld [vmem:[#allocation2 + $0x8] sm:$0xff]
    %v72 = vld [vmem:[#allocation2 + $0x10] sm:$0xff]
    %v73 = vld [vmem:[#allocation2 + $0x18] sm:$0xff]
    %v74 = vld [vmem:[#allocation2 + $0x20] sm:$0xff]
    %v75 = vld [vmem:[#allocation2 + $0x28] sm:$0xff]
    %v76 = vld [vmem:[#allocation2 + $0x30] sm:$0xff]
    %v77 = vld [vmem:[#allocation2 + $0x38] sm:$0xff]
    %v78 = vld [vmem:[#allocation2 + $0x40] sm:$0xff]
    %v79 = vld [vmem:[#allocation2 + $0x48] sm:$0xff]
    %v80 = vld [vmem:[#allocation2 + $0x50] sm:$0xff]
    %v81 = vld [vmem:[#allocation2 + $0x58] sm:$0xff]
    %v82 = vld [vmem:[#allocation2 + $0x60] sm:$0xff]
    %v83 = vld [vmem:[#allocation2 + $0x68] sm:$0xff]
    %v84 = vld [vmem:[#allocation2 + $0x70] sm:$0xff]
    %v85 = vld [vmem:[#allocation2 + $0x78] sm:$0xff]
    %v86 = vld [vmem:[#allocation2 + $0x80] sm:$0xff]
    %v87 = vld [vmem:[#allocation2 + $0x88] sm:$0xff]
    %v88 = vld [vmem:[#allocation2 + $0x90] sm:$0xff]
    %v89 = vld [vmem:[#allocation2 + $0x98] sm:$0xff]
    %v90 = vld [vmem:[#allocation2 + $0xa0] sm:$0xff]
    %v91 = vld [vmem:[#allocation2 + $0xa8] sm:$0xff]
    %v92 = vld [vmem:[#allocation2 + $0xb0] sm:$0xff]
    %v93 = vld [vmem:[#allocation2 + $0xb8] sm:$0xff]
    %v94 = vld [vmem:[#allocation2 + $0xc0] sm:$0xff]
    %v95 = vld [vmem:[#allocation2 + $0xc8] sm:$0xff]
    %v96 = vld [vmem:[#allocation2 + $0xd0] sm:$0xff]
    %v97 = vld [vmem:[#allocation2 + $0xd8] sm:$0xff]
    %v98 = vld [vmem:[#allocation2 + $0xe0] sm:$0xff]
    %v99 = vld [vmem:[#allocation2 + $0xe8] sm:$0xff]
    %v100 = vld [vmem:[#allocation2 + $0xf0] sm:$0xff]
    %v101 = vld [vmem:[#allocation2 + $0xf8] sm:$0xff]
    %v102 = vld [vmem:[%s2] sm:$0xf]
    %v104 = vlaneseq
    %v105 = vshrl.u32 %v104, 7
    %v106 = vsub.s32 0, %v105
    %v107 = vrot.slane %v102, %v106
    %v108 = vlaneseq
    %v109 = vshrl.u32 %v108, 7
    %v110 = vsub.s32 1, %v109
    %v111 = vrot.slane %v102, %v110
    %v112 = vlaneseq
    %v113 = vshrl.u32 %v112, 7
    %v114 = vsub.s32 2, %v113
    %v115 = vrot.slane %v102, %v114
    %v116 = vlaneseq
    %v117 = vshrl.u32 %v116, 7
    %v118 = vsub.s32 3, %v117
    %v119 = vrot.slane %v102, %v118
    %v156 = vunpack.c.l.b16 %v70
    %v157 = vunpack.c.h.b16 %v70
    %v158 = vunpack.c.l.b16 %v71
    %v159 = vunpack.c.h.b16 %v71
    %v160 = vunpack.c.l.b16 %v72
    %v161 = vunpack.c.h.b16 %v72
    %v162 = vunpack.c.l.b16 %v73
    %v163 = vunpack.c.h.b16 %v73
    %v164 = vunpack.c.l.b16 %v74
    %v165 = vunpack.c.h.b16 %v74
    %v166 = vunpack.c.l.b16 %v75
    %v167 = vunpack.c.h.b16 %v75
    %v168 = vunpack.c.l.b16 %v76
    %v169 = vunpack.c.h.b16 %v76
    %v170 = vunpack.c.l.b16 %v77
    %v171 = vunpack.c.h.b16 %v77
    %v172 = vunpack.c.l.b16 %v78
    %v173 = vunpack.c.h.b16 %v78
    %v174 = vunpack.c.l.b16 %v79
    %v175 = vunpack.c.h.b16 %v79
    %v176 = vunpack.c.l.b16 %v80
    %v177 = vunpack.c.h.b16 %v80
    %v178 = vunpack.c.l.b16 %v81
    %v179 = vunpack.c.h.b16 %v81
    %v180 = vunpack.c.l.b16 %v82
    %v181 = vunpack.c.h.b16 %v82
    %v182 = vunpack.c.l.b16 %v83
    %v183 = vunpack.c.h.b16 %v83
    %v184 = vunpack.c.l.b16 %v84
    %v185 = vunpack.c.h.b16 %v84
    %v186 = vunpack.c.l.b16 %v85
    %v187 = vunpack.c.h.b16 %v85
    %v188 = vunpack.c.l.b16 %v86
    %v189 = vunpack.c.h.b16 %v86
    %v190 = vunpack.c.l.b16 %v87
    %v191 = vunpack.c.h.b16 %v87
    %v192 = vunpack.c.l.b16 %v88
    %v193 = vunpack.c.h.b16 %v88
    %v194 = vunpack.c.l.b16 %v89
    %v195 = vunpack.c.h.b16 %v89
    %v196 = vunpack.c.l.b16 %v90
    %v197 = vunpack.c.h.b16 %v90
    %v198 = vunpack.c.l.b16 %v91
    %v199 = vunpack.c.h.b16 %v91
    %v200 = vunpack.c.l.b16 %v92
    %v201 = vunpack.c.h.b16 %v92
    %v202 = vunpack.c.l.b16 %v93
    %v203 = vunpack.c.h.b16 %v93
    %v204 = vunpack.c.l.b16 %v94
    %v205 = vunpack.c.h.b16 %v94
    %v206 = vunpack.c.l.b16 %v95
    %v207 = vunpack.c.h.b16 %v95
    %v208 = vunpack.c.l.b16 %v96
    %v209 = vunpack.c.h.b16 %v96
    %v210 = vunpack.c.l.b16 %v97
    %v211 = vunpack.c.h.b16 %v97
    %v212 = vunpack.c.l.b16 %v98
    %v213 = vunpack.c.h.b16 %v98
    %v214 = vunpack.c.l.b16 %v99
    %v215 = vunpack.c.h.b16 %v99
    %v216 = vunpack.c.l.b16 %v100
    %v217 = vunpack.c.h.b16 %v100
    %v218 = vunpack.c.l.b16 %v101
    %v219 = vunpack.c.h.b16 %v101
    %v220 = vpack.c.b16 %v160, %v156
    %v221 = vpack.c.b16 %v161, %v157
    %v222 = vpack.c.b16 %v162, %v158
    %v223 = vpack.c.b16 %v163, %v159
    %v224 = vpack.c.b16 %v168, %v164
    %v225 = vpack.c.b16 %v169, %v165
    %v226 = vpack.c.b16 %v170, %v166
    %v227 = vpack.c.b16 %v171, %v167
    %v228 = vpack.c.b16 %v176, %v172
    %v229 = vpack.c.b16 %v177, %v173
    %v230 = vpack.c.b16 %v178, %v174
    %v231 = vpack.c.b16 %v179, %v175
    %v232 = vpack.c.b16 %v184, %v180
    %v233 = vpack.c.b16 %v185, %v181
    %v234 = vpack.c.b16 %v186, %v182
    %v235 = vpack.c.b16 %v187, %v183
    %v236 = vpack.c.b16 %v192, %v188
    %v237 = vpack.c.b16 %v193, %v189
    %v238 = vpack.c.b16 %v194, %v190
    %v239 = vpack.c.b16 %v195, %v191
    %v240 = vpack.c.b16 %v200, %v196
    %v241 = vpack.c.b16 %v201, %v197
    %v242 = vpack.c.b16 %v202, %v198
    %v243 = vpack.c.b16 %v203, %v199
    %v244 = vpack.c.b16 %v208, %v204
    %v245 = vpack.c.b16 %v209, %v205
    %v246 = vpack.c.b16 %v210, %v206
    %v247 = vpack.c.b16 %v211, %v207
    %v248 = vpack.c.b16 %v216, %v212
    %v249 = vpack.c.b16 %v217, %v213
    %v250 = vpack.c.b16 %v218, %v214
    %v251 = vpack.c.b16 %v219, %v215
    %284 = vmatprep.subr.bf16.mxu0 %v221
    %285 = vmatpush1.bf16.msra.mxu0 %v220
    %286 = vmatprep.subr.bf16.mxu0 %v225
    %287 = vmatpush1.bf16.msra.mxu0 %v224
    %288 = vmatprep.subr.bf16.mxu0 %v229
    %289 = vmatpush1.bf16.msra.mxu0 %v228
    %290 = vmatprep.subr.bf16.mxu0 %v233
    %291 = vmatpush1.bf16.msra.mxu0 %v232
    %292 = vmatprep.subr.bf16.mxu0 %v237
    %293 = vmatpush1.bf16.msra.mxu0 %v236
    %294 = vmatprep.subr.bf16.mxu0 %v241
    %295 = vmatpush1.bf16.msra.mxu0 %v240
    %296 = vmatprep.subr.bf16.mxu0 %v245
    %297 = vmatpush1.bf16.msra.mxu0 %v244
    %298 = vmatprep.subr.bf16.mxu0 %v249
    %299 = vmatpush1.bf16.msra.mxu0 %v248
    %300 = vmatprep.subr.bf16.mxu0 0
    %301 = vmatpush1.bf16.msra.mxu0 0
    %302 = vmatprep.subr.bf16.mxu0 0
    %303 = vmatpush1.bf16.msra.mxu0 0
    %304 = vmatprep.subr.bf16.mxu0 0
    %305 = vmatpush1.bf16.msra.mxu0 0
    %306 = vmatprep.subr.bf16.mxu0 0
    %307 = vmatpush1.bf16.msra.mxu0 0
    %308 = vmatprep.subr.bf16.mxu0 0
    %309 = vmatpush1.bf16.msra.mxu0 0
    %310 = vmatprep.subr.bf16.mxu0 0
    %311 = vmatpush1.bf16.msra.mxu0 0
    %312 = vmatprep.subr.bf16.mxu0 0
    %313 = vmatpush1.bf16.msra.mxu0 0
    %314 = vmatprep.subr.bf16.mxu0 0
    %315 = vmatpush1.bf16.msra.mxu0 0
    %316 = vmatprep.mubr.bf16.mxu0 0
    %317 = vmatmul.mubr.bf16.gmra.mrb[0].mxu0 %v69
    %v318 = vpop.f32.mrb[0].mxu0
    %v319 = vadd.f32 %v107, %v318
    %v320 = vpop.f32.mrb[0].mxu0
    %v321 = vadd.f32 %v111, %v320
    %v322 = vpop.f32.mrb[0].mxu0
    %v323 = vpop.f32.mrb[0].mxu0
    %324 = vdwg.mxu0
    %325 = vmatprep.subr.bf16.mxu0 %v223
    %326 = vmatpush1.bf16.msra.mxu0 %v222
    %327 = vmatprep.subr.bf16.mxu0 %v227
    %328 = vmatpush1.bf16.msra.mxu0 %v226
    %329 = vmatprep.subr.bf16.mxu0 %v231
    %330 = vmatpush1.bf16.msra.mxu0 %v230
    %331 = vmatprep.subr.bf16.mxu0 %v235
    %332 = vmatpush1.bf16.msra.mxu0 %v234
    %333 = vmatprep.subr.bf16.mxu0 %v239
    %334 = vmatpush1.bf16.msra.mxu0 %v238
    %335 = vmatprep.subr.bf16.mxu0 %v243
    %336 = vmatpush1.bf16.msra.mxu0 %v242
    %337 = vmatprep.subr.bf16.mxu0 %v247
    %338 = vmatpush1.bf16.msra.mxu0 %v246
    %339 = vmatprep.subr.bf16.mxu0 %v251
    %340 = vmatpush1.bf16.msra.mxu0 %v250
    %341 = vmatprep.subr.bf16.mxu0 0
    %342 = vmatpush1.bf16.msra.mxu0 0
    %343 = vmatprep.subr.bf16.mxu0 0
    %344 = vmatpush1.bf16.msra.mxu0 0
    %345 = vmatprep.subr.bf16.mxu0 0
    %346 = vmatpush1.bf16.msra.mxu0 0
    %347 = vmatprep.subr.bf16.mxu0 0
    %348 = vmatpush1.bf16.msra.mxu0 0
    %349 = vmatprep.subr.bf16.mxu0 0
    %350 = vmatpush1.bf16.msra.mxu0 0
    %351 = vmatprep.subr.bf16.mxu0 0
    %352 = vmatpush1.bf16.msra.mxu0 0
    %353 = vmatprep.subr.bf16.mxu0 0
    %354 = vmatpush1.bf16.msra.mxu0 0
    %355 = vmatprep.subr.bf16.mxu0 0
    %356 = vmatpush1.bf16.msra.mxu0 0
    %357 = vmatprep.mubr.bf16.mxu0 0
    %358 = vmatmul.mubr.bf16.gmra.mrb[0].mxu0 %v69
    %v359 = vpop.f32.mrb[0].mxu0
    %v360 = vadd.f32 %v115, %v359
    %v361 = vpop.f32.mrb[0].mxu0
    %v362 = vadd.f32 %v119, %v361
    %v363 = vpop.f32.mrb[0].mxu0
    %v364 = vpop.f32.mrb[0].mxu0
    %365 = vdwg.mxu0
    %v366 = vmax.f32 %v319, 0.0
    %v367 = vmax.f32 %v321, 0.0
    %v368 = vmax.f32 %v360, 0.0
    %v369 = vmax.f32 %v362, 0.0
    %v370 = vpack.c.bf16 %v366, %v366
    %v371 = vpack.c.bf16 %v367, %v367
    %v372 = vpack.c.bf16 %v368, %v368
    %v373 = vpack.c.bf16 %v369, %v369
    %v374 = vld [vmem:[#allocation5] sm:$0xf]
    %v375 = vld [vmem:[#allocation5 + $0x4] sm:$0xf]
    %v376 = vld [vmem:[#allocation5 + $0x8] sm:$0xf]
    %v377 = vld [vmem:[#allocation5 + $0xc] sm:$0xf]
    %v378 = vld [vmem:[#allocation5 + $0x10] sm:$0xf]
    %v379 = vld [vmem:[#allocation5 + $0x14] sm:$0xf]
    %v380 = vld [vmem:[#allocation5 + $0x18] sm:$0xf]
    %v381 = vld [vmem:[#allocation5 + $0x1c] sm:$0xf]
    %v382 = vld [vmem:[#allocation5 + $0x20] sm:$0xf]
    %v383 = vld [vmem:[#allocation5 + $0x24] sm:$0xf]
    %v384 = vld [vmem:[#allocation5 + $0x28] sm:$0xf]
    %v385 = vld [vmem:[#allocation5 + $0x2c] sm:$0xf]
    %v386 = vld [vmem:[#allocation5 + $0x30] sm:$0xf]
    %v387 = vld [vmem:[#allocation5 + $0x34] sm:$0xf]
    %v388 = vld [vmem:[#allocation5 + $0x38] sm:$0xf]
    %v389 = vld [vmem:[#allocation5 + $0x3c] sm:$0xf]
    %v390 = vld [vmem:[#allocation5 + $0x40] sm:$0xf]
    %v391 = vld [vmem:[#allocation5 + $0x44] sm:$0xf]
    %v392 = vld [vmem:[#allocation5 + $0x48] sm:$0xf]
    %v393 = vld [vmem:[#allocation5 + $0x4c] sm:$0xf]
    %v394 = vld [vmem:[#allocation5 + $0x50] sm:$0xf]
    %v395 = vld [vmem:[#allocation5 + $0x54] sm:$0xf]
    %v396 = vld [vmem:[#allocation5 + $0x58] sm:$0xf]
    %v397 = vld [vmem:[#allocation5 + $0x5c] sm:$0xf]
    %v398 = vld [vmem:[#allocation5 + $0x60] sm:$0xf]
    %v399 = vld [vmem:[#allocation5 + $0x64] sm:$0xf]
    %v400 = vld [vmem:[#allocation5 + $0x68] sm:$0xf]
    %v401 = vld [vmem:[#allocation5 + $0x6c] sm:$0xf]
    %v402 = vld [vmem:[#allocation5 + $0x70] sm:$0xf]
    %v403 = vld [vmem:[#allocation5 + $0x74] sm:$0xf]
    %v404 = vld [vmem:[#allocation5 + $0x78] sm:$0xf]
    %v405 = vld [vmem:[#allocation5 + $0x7c] sm:$0xf]
    %v406 = vld [vmem:[#allocation5 + $0x80] sm:$0xf]
    %v407 = vld [vmem:[#allocation5 + $0x84] sm:$0xf]
    %v408 = vld [vmem:[#allocation5 + $0x88] sm:$0xf]
    %v409 = vld [vmem:[#allocation5 + $0x8c] sm:$0xf]
    %v410 = vld [vmem:[#allocation5 + $0x90] sm:$0xf]
    %v411 = vld [vmem:[#allocation5 + $0x94] sm:$0xf]
    %v412 = vld [vmem:[#allocation5 + $0x98] sm:$0xf]
    %v413 = vld [vmem:[#allocation5 + $0x9c] sm:$0xf]
    %v414 = vld [vmem:[#allocation5 + $0xa0] sm:$0xf]
    %v415 = vld [vmem:[#allocation5 + $0xa4] sm:$0xf]
    %v416 = vld [vmem:[#allocation5 + $0xa8] sm:$0xf]
    %v417 = vld [vmem:[#allocation5 + $0xac] sm:$0xf]
    %v418 = vld [vmem:[#allocation5 + $0xb0] sm:$0xf]
    %v419 = vld [vmem:[#allocation5 + $0xb4] sm:$0xf]
    %v420 = vld [vmem:[#allocation5 + $0xb8] sm:$0xf]
    %v421 = vld [vmem:[#allocation5 + $0xbc] sm:$0xf]
    %v422 = vld [vmem:[#allocation5 + $0xc0] sm:$0xf]
    %v423 = vld [vmem:[#allocation5 + $0xc4] sm:$0xf]
    %v424 = vld [vmem:[#allocation5 + $0xc8] sm:$0xf]
    %v425 = vld [vmem:[#allocation5 + $0xcc] sm:$0xf]
    %v426 = vld [vmem:[#allocation5 + $0xd0] sm:$0xf]
    %v427 = vld [vmem:[#allocation5 + $0xd4] sm:$0xf]
    %v428 = vld [vmem:[#allocation5 + $0xd8] sm:$0xf]
    %v429 = vld [vmem:[#allocation5 + $0xdc] sm:$0xf]
    %v430 = vld [vmem:[#allocation5 + $0xe0] sm:$0xf]
    %v431 = vld [vmem:[#allocation5 + $0xe4] sm:$0xf]
    %v432 = vld [vmem:[#allocation5 + $0xe8] sm:$0xf]
    %v433 = vld [vmem:[#allocation5 + $0xec] sm:$0xf]
    %v434 = vld [vmem:[#allocation5 + $0xf0] sm:$0xf]
    %v435 = vld [vmem:[#allocation5 + $0xf4] sm:$0xf]
    %v436 = vld [vmem:[#allocation5 + $0xf8] sm:$0xf]
    %v437 = vld [vmem:[#allocation5 + $0xfc] sm:$0xf]
    %v438 = vld [vmem:[%s4] sm:$0x1]
    %v440 = vlaneseq
    %v441 = vshrl.u32 %v440, 7
    %v442 = vsub.s32 0, %v441
    %v443 = vrot.slane %v438, %v442
    %v509 = vunpack.c.l.b16 %v374
    %v510 = vunpack.c.l.b16 %v375
    %v511 = vunpack.c.l.b16 %v376
    %v512 = vunpack.c.l.b16 %v377
    %v513 = vunpack.c.l.b16 %v378
    %v514 = vunpack.c.l.b16 %v379
    %v515 = vunpack.c.l.b16 %v380
    %v516 = vunpack.c.l.b16 %v381
    %v517 = vunpack.c.l.b16 %v382
    %v518 = vunpack.c.l.b16 %v383
    %v519 = vunpack.c.l.b16 %v384
    %v520 = vunpack.c.l.b16 %v385
    %v521 = vunpack.c.l.b16 %v386
    %v522 = vunpack.c.l.b16 %v387
    %v523 = vunpack.c.l.b16 %v388
    %v524 = vunpack.c.l.b16 %v389
    %v525 = vunpack.c.l.b16 %v390
    %v526 = vunpack.c.l.b16 %v391
    %v527 = vunpack.c.l.b16 %v392
    %v528 = vunpack.c.l.b16 %v393
    %v529 = vunpack.c.l.b16 %v394
    %v530 = vunpack.c.l.b16 %v395
    %v531 = vunpack.c.l.b16 %v396
    %v532 = vunpack.c.l.b16 %v397
    %v533 = vunpack.c.l.b16 %v398
    %v534 = vunpack.c.l.b16 %v399
    %v535 = vunpack.c.l.b16 %v400
    %v536 = vunpack.c.l.b16 %v401
    %v537 = vunpack.c.l.b16 %v402
    %v538 = vunpack.c.l.b16 %v403
    %v539 = vunpack.c.l.b16 %v404
    %v540 = vunpack.c.l.b16 %v405
    %v541 = vunpack.c.l.b16 %v406
    %v542 = vunpack.c.l.b16 %v407
    %v543 = vunpack.c.l.b16 %v408
    %v544 = vunpack.c.l.b16 %v409
    %v545 = vunpack.c.l.b16 %v410
    %v546 = vunpack.c.l.b16 %v411
    %v547 = vunpack.c.l.b16 %v412
    %v548 = vunpack.c.l.b16 %v413
    %v549 = vunpack.c.l.b16 %v414
    %v550 = vunpack.c.l.b16 %v415
    %v551 = vunpack.c.l.b16 %v416
    %v552 = vunpack.c.l.b16 %v417
    %v553 = vunpack.c.l.b16 %v418
    %v554 = vunpack.c.l.b16 %v419
    %v555 = vunpack.c.l.b16 %v420
    %v556 = vunpack.c.l.b16 %v421
    %v557 = vunpack.c.l.b16 %v422
    %v558 = vunpack.c.l.b16 %v423
    %v559 = vunpack.c.l.b16 %v424
    %v560 = vunpack.c.l.b16 %v425
    %v561 = vunpack.c.l.b16 %v426
    %v562 = vunpack.c.l.b16 %v427
    %v563 = vunpack.c.l.b16 %v428
    %v564 = vunpack.c.l.b16 %v429
    %v565 = vunpack.c.l.b16 %v430
    %v566 = vunpack.c.l.b16 %v431
    %v567 = vunpack.c.l.b16 %v432
    %v568 = vunpack.c.l.b16 %v433
    %v569 = vunpack.c.l.b16 %v434
    %v570 = vunpack.c.l.b16 %v435
    %v571 = vunpack.c.l.b16 %v436
    %v572 = vunpack.c.l.b16 %v437
    %v573 = vpack.c.b16 %v510, %v509
    %v574 = vpack.c.b16 %v512, %v511
    %v575 = vpack.c.b16 %v514, %v513
    %v576 = vpack.c.b16 %v516, %v515
    %v577 = vpack.c.b16 %v518, %v517
    %v578 = vpack.c.b16 %v520, %v519
    %v579 = vpack.c.b16 %v522, %v521
    %v580 = vpack.c.b16 %v524, %v523
    %v581 = vpack.c.b16 %v526, %v525
    %v582 = vpack.c.b16 %v528, %v527
    %v583 = vpack.c.b16 %v530, %v529
    %v584 = vpack.c.b16 %v532, %v531
    %v585 = vpack.c.b16 %v534, %v533
    %v586 = vpack.c.b16 %v536, %v535
    %v587 = vpack.c.b16 %v538, %v537
    %v588 = vpack.c.b16 %v540, %v539
    %v589 = vpack.c.b16 %v542, %v541
    %v590 = vpack.c.b16 %v544, %v543
    %v591 = vpack.c.b16 %v546, %v545
    %v592 = vpack.c.b16 %v548, %v547
    %v593 = vpack.c.b16 %v550, %v549
    %v594 = vpack.c.b16 %v552, %v551
    %v595 = vpack.c.b16 %v554, %v553
    %v596 = vpack.c.b16 %v556, %v555
    %v597 = vpack.c.b16 %v558, %v557
    %v598 = vpack.c.b16 %v560, %v559
    %v599 = vpack.c.b16 %v562, %v561
    %v600 = vpack.c.b16 %v564, %v563
    %v601 = vpack.c.b16 %v566, %v565
    %v602 = vpack.c.b16 %v568, %v567
    %v603 = vpack.c.b16 %v570, %v569
    %v604 = vpack.c.b16 %v572, %v571
    %637 = vmatprep.subr.bf16.mxu0 0
    %638 = vmatpush1.bf16.msra.mxu0 %v573
    %639 = vmatprep.subr.bf16.mxu0 0
    %640 = vmatpush1.bf16.msra.mxu0 %v574
    %641 = vmatprep.subr.bf16.mxu0 0
    %642 = vmatpush1.bf16.msra.mxu0 %v575
    %643 = vmatprep.subr.bf16.mxu0 0
    %644 = vmatpush1.bf16.msra.mxu0 %v576
    %645 = vmatprep.subr.bf16.mxu0 0
    %646 = vmatpush1.bf16.msra.mxu0 %v577
    %647 = vmatprep.subr.bf16.mxu0 0
    %648 = vmatpush1.bf16.msra.mxu0 %v578
    %649 = vmatprep.subr.bf16.mxu0 0
    %650 = vmatpush1.bf16.msra.mxu0 %v579
    %651 = vmatprep.subr.bf16.mxu0 0
    %652 = vmatpush1.bf16.msra.mxu0 %v580
    %653 = vmatprep.subr.bf16.mxu0 0
    %654 = vmatpush1.bf16.msra.mxu0 %v581
    %655 = vmatprep.subr.bf16.mxu0 0
    %656 = vmatpush1.bf16.msra.mxu0 %v582
    %657 = vmatprep.subr.bf16.mxu0 0
    %658 = vmatpush1.bf16.msra.mxu0 %v583
    %659 = vmatprep.subr.bf16.mxu0 0
    %660 = vmatpush1.bf16.msra.mxu0 %v584
    %661 = vmatprep.subr.bf16.mxu0 0
    %662 = vmatpush1.bf16.msra.mxu0 %v585
    %663 = vmatprep.subr.bf16.mxu0 0
    %664 = vmatpush1.bf16.msra.mxu0 %v586
    %665 = vmatprep.subr.bf16.mxu0 0
    %666 = vmatpush1.bf16.msra.mxu0 %v587
    %667 = vmatprep.subr.bf16.mxu0 0
    %668 = vmatpush1.bf16.msra.mxu0 %v588
    %669 = vmatprep.mubr.bf16.mxu0 %v371
    %670 = vmatmul.mubr.bf16.gmra.mrb[0].mxu0 %v370
    %v671 = vpop.f32.mrb[0].mxu0
    %v672 = vadd.f32 %v443, %v671
    %v673 = vpop.f32.mrb[0].mxu0
    %v674 = vpop.f32.mrb[0].mxu0
    %v675 = vpop.f32.mrb[0].mxu0
    %676 = vdwg.mxu0
    %677 = vmatprep.subr.bf16.mxu0 0
    %678 = vmatpush1.bf16.msra.mxu0 %v589
    %679 = vmatprep.subr.bf16.mxu0 0
    %680 = vmatpush1.bf16.msra.mxu0 %v590
    %681 = vmatprep.subr.bf16.mxu0 0
    %682 = vmatpush1.bf16.msra.mxu0 %v591
    %683 = vmatprep.subr.bf16.mxu0 0
    %684 = vmatpush1.bf16.msra.mxu0 %v592
    %685 = vmatprep.subr.bf16.mxu0 0
    %686 = vmatpush1.bf16.msra.mxu0 %v593
    %687 = vmatprep.subr.bf16.mxu0 0
    %688 = vmatpush1.bf16.msra.mxu0 %v594
    %689 = vmatprep.subr.bf16.mxu0 0
    %690 = vmatpush1.bf16.msra.mxu0 %v595
    %691 = vmatprep.subr.bf16.mxu0 0
    %692 = vmatpush1.bf16.msra.mxu0 %v596
    %693 = vmatprep.subr.bf16.mxu0 0
    %694 = vmatpush1.bf16.msra.mxu0 %v597
    %695 = vmatprep.subr.bf16.mxu0 0
    %696 = vmatpush1.bf16.msra.mxu0 %v598
    %697 = vmatprep.subr.bf16.mxu0 0
    %698 = vmatpush1.bf16.msra.mxu0 %v599
    %699 = vmatprep.subr.bf16.mxu0 0
    %700 = vmatpush1.bf16.msra.mxu0 %v600
    %701 = vmatprep.subr.bf16.mxu0 0
    %702 = vmatpush1.bf16.msra.mxu0 %v601
    %703 = vmatprep.subr.bf16.mxu0 0
    %704 = vmatpush1.bf16.msra.mxu0 %v602
    %705 = vmatprep.subr.bf16.mxu0 0
    %706 = vmatpush1.bf16.msra.mxu0 %v603
    %707 = vmatprep.subr.bf16.mxu0 0
    %708 = vmatpush1.bf16.msra.mxu0 %v604
    %709 = vmatprep.mubr.bf16.mxu0 %v373
    %710 = vmatmul.mubr.bf16.gmra.mrb[0].mxu0 %v372
    %v711 = vpop.f32.mrb[0].mxu0
    %v712 = vadd.f32 %v672, %v711
    %v713 = vpop.f32.mrb[0].mxu0
    %v714 = vpop.f32.mrb[0].mxu0
    %v715 = vpop.f32.mrb[0].mxu0
    %716 = vdwg.mxu0
    %v717 = vmax.f32 %v712, 0.0
    %v718 = vpack.c.bf16 %v717, %v717
    %v719 = vld [vmem:[#allocation7] sm:$0xf]
    %v720 = vld [vmem:[#allocation7 + $0x4] sm:$0xf]
    %v721 = vld [vmem:[#allocation7 + $0x8] sm:$0xf]
    %v722 = vld [vmem:[#allocation7 + $0xc] sm:$0xf]
    %v723 = vld [vmem:[#allocation7 + $0x10] sm:$0xf]
    %v724 = vld [vmem:[#allocation7 + $0x14] sm:$0xf]
    %v725 = vld [vmem:[#allocation7 + $0x18] sm:$0xf]
    %v726 = vld [vmem:[#allocation7 + $0x1c] sm:$0xf]
    %v727 = vld [vmem:[#allocation7 + $0x20] sm:$0xf]
    %v728 = vld [vmem:[#allocation7 + $0x24] sm:$0xf]
    %v729 = vld [vmem:[#allocation7 + $0x28] sm:$0xf]
    %v730 = vld [vmem:[#allocation7 + $0x2c] sm:$0xf]
    %v731 = vld [vmem:[#allocation7 + $0x30] sm:$0xf]
    %v732 = vld [vmem:[#allocation7 + $0x34] sm:$0xf]
    %v733 = vld [vmem:[#allocation7 + $0x38] sm:$0xf]
    %v734 = vld [vmem:[#allocation7 + $0x3c] sm:$0xf]
    %v735 = vld [vmem:[%s6] sm:$0x1]
    %v737 = vlaneseq
    %v738 = vshrl.u32 %v737, 7
    %v739 = vsub.s32 0, %v738
    %v740 = vrot.slane %v735, %v739
    %v758 = vunpack.c.l.b16 %v719
    %v759 = vunpack.c.l.b16 %v720
    %v760 = vunpack.c.l.b16 %v721
    %v761 = vunpack.c.l.b16 %v722
    %v762 = vunpack.c.l.b16 %v723
    %v763 = vunpack.c.l.b16 %v724
    %v764 = vunpack.c.l.b16 %v725
    %v765 = vunpack.c.l.b16 %v726
    %v766 = vunpack.c.l.b16 %v727
    %v767 = vunpack.c.l.b16 %v728
    %v768 = vunpack.c.l.b16 %v729
    %v769 = vunpack.c.l.b16 %v730
    %v770 = vunpack.c.l.b16 %v731
    %v771 = vunpack.c.l.b16 %v732
    %v772 = vunpack.c.l.b16 %v733
    %v773 = vunpack.c.l.b16 %v734
    %v774 = vpack.c.b16 %v759, %v758
    %v775 = vpack.c.b16 %v761, %v760
    %v776 = vpack.c.b16 %v763, %v762
    %v777 = vpack.c.b16 %v765, %v764
    %v778 = vpack.c.b16 %v767, %v766
    %v779 = vpack.c.b16 %v769, %v768
    %v780 = vpack.c.b16 %v771, %v770
    %v781 = vpack.c.b16 %v773, %v772
    %790 = vmatprep.subr.bf16.mxu0 0
    %791 = vmatpush1.bf16.msra.mxu0 %v774
    %792 = vmatprep.subr.bf16.mxu0 0
    %793 = vmatpush1.bf16.msra.mxu0 %v775
    %794 = vmatprep.subr.bf16.mxu0 0
    %795 = vmatpush1.bf16.msra.mxu0 %v776
    %796 = vmatprep.subr.bf16.mxu0 0
    %797 = vmatpush1.bf16.msra.mxu0 %v777
    %798 = vmatprep.subr.bf16.mxu0 0
    %799 = vmatpush1.bf16.msra.mxu0 %v778
    %800 = vmatprep.subr.bf16.mxu0 0
    %801 = vmatpush1.bf16.msra.mxu0 %v779
    %802 = vmatprep.subr.bf16.mxu0 0
    %803 = vmatpush1.bf16.msra.mxu0 %v780
    %804 = vmatprep.subr.bf16.mxu0 0
    %805 = vmatpush1.bf16.msra.mxu0 %v781
    %806 = vmatprep.subr.bf16.mxu0 0
    %807 = vmatpush1.bf16.msra.mxu0 0
    %808 = vmatprep.subr.bf16.mxu0 0
    %809 = vmatpush1.bf16.msra.mxu0 0
    %810 = vmatprep.subr.bf16.mxu0 0
    %811 = vmatpush1.bf16.msra.mxu0 0
    %812 = vmatprep.subr.bf16.mxu0 0
    %813 = vmatpush1.bf16.msra.mxu0 0
    %814 = vmatprep.subr.bf16.mxu0 0
    %815 = vmatpush1.bf16.msra.mxu0 0
    %816 = vmatprep.subr.bf16.mxu0 0
    %817 = vmatpush1.bf16.msra.mxu0 0
    %818 = vmatprep.subr.bf16.mxu0 0
    %819 = vmatpush1.bf16.msra.mxu0 0
    %820 = vmatprep.subr.bf16.mxu0 0
    %821 = vmatpush1.bf16.msra.mxu0 0
    %822 = vmatprep.mubr.bf16.mxu0 0
    %823 = vmatmul.mubr.bf16.gmra.mrb[0].mxu0 %v718
    %v824 = vpop.f32.mrb[0].mxu0
    %v825 = vadd.f32 %v740, %v824
    %v826 = vpop.f32.mrb[0].mxu0
    %v827 = vpop.f32.mrb[0].mxu0
    %v828 = vpop.f32.mrb[0].mxu0
    %829 = vdwg.mxu0
    %830 = vst [vmem:[#allocation8] sm:$0xff] %v825
    // Predicated region
    $region42: #{vector_model_forward.1} parent=1 // pred_check
      _
    $region43: #{vector_model_forward.1} parent=1 // pred_check_branch
      %832 = sbr.rel (0) target = $region45
    $region44: #{vector_model_forward.1} parent=1 // pred_region
      %s834 = ssub.s32 128, 128
      %835 = vsyncadd [#allocation4], %s834
      %s837 = sshll.u32 [#allocation8], 4
      %s838 = int_to_ptr.vmem [resolvable:$true] %s837
      %840 = dma.vmem_to_hbm [thread:$0]  %s838, 128, %s7, [#allocation4]
    $region45: #{vector_model_forward.1} parent=1 // pred_fallthru
      _
    // Predicated region
    $region46: #{vector_model_forward.1} parent=1 // pred_check
      _
    $region47: #{vector_model_forward.1} parent=1 // pred_check_branch
      %842 = sbr.rel (0) target = $region49
    $region48: #{vector_model_forward.1} parent=1 // pred_region
      %843 = dma.done [#allocation4], 128
    $region49: #{vector_model_forward.1} parent=1 // pred_fallthru
      _
    %844 = vsyncpa [#allocation3], 1
    %845 = vsyncpa [#allocation6], 1
    %846 = vsyncpa [#allocation4], 1

</llo_original>
